<compile_context>
chip_gen: v6e
topology: v6e:2x2x1
jax: 0.10.0
libtpu: 0.0.40
codegen_flags: <defaults>
</compile_context>

<pallas_src>
import functools

import jax
import jax.numpy as jnp
from jax.experimental import pallas as pl
from jax.experimental.pallas import tpu as pltpu

_EPS = 1e-5  # PyTorch default for InstanceNorm3d / BatchNorm3d


# --------------------------------------------------------------------------
# Tile-size selection helpers
# --------------------------------------------------------------------------
def _vmem_capacity_bytes():
    try:
        return int(pltpu.get_tpu_info().vmem_capacity_bytes)
    except Exception:
        return 64 * 1024 * 1024  # conservative (v7x per-TC VMEM)


def _largest_divisor(n, limit, multiple_of=1):
    """Largest divisor of n that is <= limit and a multiple of `multiple_of`."""
    if limit <= 0:
        return None
    best = None
    i = 1
    while i * i <= n:
        if n % i == 0:
            for d in (i, n // i):
                if d <= limit and d % multiple_of == 0 and (best is None or d > best):
                    best = d
        i += 1
    return best


def _row_tile(C, max_rows):
    """Row (channel) tile: a multiple of 8 dividing C, else full C (always legal)."""
    opts = [d for d in range(8, C + 1, 8) if C % d == 0 and d <= max_rows]
    if opts:
        return max(opts)
    return C


def _choose_2pass_tiles(C, S, target_elems):
    tc = _row_tile(C, 8)                       # minimal sublane-aligned row tile
    col_limit = max(1, target_elems // tc)
    if S <= col_limit:
        ts = S
    else:
        ts = _largest_divisor(S, max(128, col_limit), multiple_of=128)
        if ts is None:
            # TODO(synk): S has no 128-aligned divisor that fits the VMEM budget;
            # fall back to a full-extent column block (pathological shapes only).
            ts = S
    # Grow the row tile to fill the remaining budget (bigger tiles amortize the
    # ~0.35 us per-grid-step overhead; kernel is HBM-bandwidth bound).
    tc = _row_tile(C, max(8, target_elems // ts))
    return tc, ts


# --------------------------------------------------------------------------
# Kernels
# --------------------------------------------------------------------------
def _fused_kernel(x_ref, o_ref, *, eps):
    # x_ref: (N, TC, S) -- full (n, s) reduction extent resident in one block.
    x = x_ref[...].astype(jnp.float32)
    mean = jnp.mean(x, axis=(0, 2), keepdims=True)
    xc = x - mean
    var = jnp.mean(xc * xc, axis=(0, 2), keepdims=True)
    o_ref[...] = (xc * jax.lax.rsqrt(var + eps)).astype(o_ref.dtype)


def _stats_kernel(x_ref, mean_ref, inv_ref, sum_ref, sq_ref, *, eps, inv_count):
    # Grid: (p, c, n, k); n and k are reduction ("arbitrary") axes.
    n = pl.program_id(2)
    k = pl.program_id(3)

    @pl.when(jnp.logical_and(n == 0, k == 0))
    def _():
        sum_ref[...] = jnp.zeros_like(sum_ref)
        sq_ref[...] = jnp.zeros_like(sq_ref)

    x = x_ref[...].astype(jnp.float32)                      # (TC, TS)
    sum_ref[...] += jnp.sum(x, axis=-1, keepdims=True)      # (TC, 1)
    sq_ref[...] += jnp.sum(x * x, axis=-1, keepdims=True)   # (TC, 1)

    @pl.when(jnp.logical_and(n == pl.num_programs(2) - 1,
                             k == pl.num_programs(3) - 1))
    def _():
        mean = sum_ref[...] * inv_count
        var = jnp.maximum(sq_ref[...] * inv_count - mean * mean, 0.0)
        mean_ref[...] = mean
        inv_ref[...] = jax.lax.rsqrt(var + eps)


def _apply_kernel(x_ref, mean_ref, inv_ref, o_ref):
    x = x_ref[...].astype(jnp.float32)                      # (TC, TS)
    o_ref[...] = ((x - mean_ref[...]) * inv_ref[...]).astype(o_ref.dtype)


# --------------------------------------------------------------------------
# Driver: normalize (P, N, C, S) per (p, c) over (n, s)
# --------------------------------------------------------------------------
def _norm4d(x4, eps=_EPS, target_elems=None):
    P, N, C, S = x4.shape
    itemsize = jnp.dtype(x4.dtype).itemsize
    capacity = _vmem_capacity_bytes()
    vmem_limit = int(capacity * 0.7)
    if target_elems is None:
        # Per-element live bytes: double-buffered in + out (+ f32 temporaries).
        bytes_per_elem = 4 * itemsize + 12
        target_elems = max(8 * 128, int(0.6 * vmem_limit) // bytes_per_elem)

    # ---------------- fused single-pass path ----------------
    tc_fused = _row_tile(C, max(1, target_elems // max(1, N * S)))
    if N * S * tc_fused <= target_elems:
        return pl.pallas_call(
            functools.partial(_fused_kernel, eps=eps),
            out_shape=jax.ShapeDtypeStruct(x4.shape, x4.dtype),
            grid_spec=pltpu.PrefetchScalarGridSpec(
                num_scalar_prefetch=0,
                grid=(P, C // tc_fused),
                in_specs=[pl.BlockSpec((None, N, tc_fused, S),
                                       lambda p, c: (p, 0, c, 0))],
                out_specs=pl.BlockSpec((None, N, tc_fused, S),
                                       lambda p, c: (p, 0, c, 0)),
            ),
            compiler_params=pltpu.CompilerParams(
                dimension_semantics=("parallel", "parallel"),
                vmem_limit_bytes=vmem_limit),
        )(x4)

    # ---------------- column-tiled two-pass path ----------------
    tc, ts = _choose_2pass_tiles(C, S, target_elems)
    grid = (P, C // tc, N, S // ts)

    mean, inv = pl.pallas_call(
        functools.partial(_stats_kernel, eps=eps, inv_count=1.0 / float(N * S)),
        out_shape=(jax.ShapeDtypeStruct((P, C, 1), jnp.float32),
                   jax.ShapeDtypeStruct((P, C, 1), jnp.float32)),
        grid_spec=pltpu.PrefetchScalarGridSpec(
            num_scalar_prefetch=0,
            grid=grid,
            in_specs=[pl.BlockSpec((None, None, tc, ts),
                                   lambda p, c, n, k: (p, n, c, k))],
            out_specs=(pl.BlockSpec((None, tc, 1), lambda p, c, n, k: (p, c, 0)),
                       pl.BlockSpec((None, tc, 1), lambda p, c, n, k: (p, c, 0))),
            scratch_shapes=[pltpu.VMEM((tc, 1), jnp.float32),
                            pltpu.VMEM((tc, 1), jnp.float32)],
        ),
        compiler_params=pltpu.CompilerParams(
            dimension_semantics=("parallel", "parallel", "arbitrary", "arbitrary"),
            vmem_limit_bytes=vmem_limit),
    )(x4)

    return pl.pallas_call(
        _apply_kernel,
        out_shape=jax.ShapeDtypeStruct(x4.shape, x4.dtype),
        grid_spec=pltpu.PrefetchScalarGridSpec(
            num_scalar_prefetch=0,
            grid=grid,
            in_specs=[pl.BlockSpec((None, None, tc, ts),
                                   lambda p, c, n, k: (p, n, c, k)),
                      pl.BlockSpec((None, tc, 1), lambda p, c, n, k: (p, c, 0)),
                      pl.BlockSpec((None, tc, 1), lambda p, c, n, k: (p, c, 0))],
            out_specs=pl.BlockSpec((None, None, tc, ts),
                                   lambda p, c, n, k: (p, n, c, k)),
        ),
        compiler_params=pltpu.CompilerParams(
            dimension_semantics=("parallel", "parallel", "parallel", "parallel"),
            vmem_limit_bytes=vmem_limit),
    )(x4, mean, inv)


# --------------------------------------------------------------------------
# Norm-type specific views (free reshapes only; no transposes)
# --------------------------------------------------------------------------
def _instance_norm(planes, eps=_EPS, target_elems=None):
    # planes: (P, N, C, D, H, W); stats per (p, n, c) over (D, H, W)
    P, N, C, D, H, W = planes.shape
    x4 = planes.reshape(1, 1, P * N * C, D * H * W)
    return _norm4d(x4, eps=eps, target_elems=target_elems).reshape(planes.shape)


def _batch_norm(planes, eps=_EPS, target_elems=None):
    # planes: (P, N, C, D, H, W); stats per (p, c) over (N, D, H, W)
    # (training-mode batch statistics, affine=False, no running-stat update)
    P, N, C, D, H, W = planes.shape
    x4 = planes.reshape(P, N, C, D * H * W)
    return _norm4d(x4, eps=eps, target_elems=target_elems).reshape(planes.shape)


@functools.partial(jax.jit, static_argnames=("norm_type", "_target_elems"))
def normalization(x, norm_type="instance", _target_elems=None):
    """Forward pass of the Normalization module.

    x: (N, C, D, H, W), real or complex.
    norm_type: 'none' | 'instance' | 'batch'
    """
    if norm_type == "none":
        return x
    elif norm_type == "instance":
        norm_fn = _instance_norm
    elif norm_type == "batch":
        norm_fn = _batch_norm
    else:
        raise ValueError("Invalid normalization type: %s" % norm_type)

    if jnp.iscomplexobj(x):
        # torch.complex(norm(x.real), norm(x.imag)): both planes normalized in a
        # single Pallas launch (stacked along a leading plane axis).
        planes = jnp.stack([jnp.real(x), jnp.imag(x)], axis=0)
        y = norm_fn(planes, target_elems=_target_elems)
        return jax.lax.complex(y[0], y[1])
    else:
        return norm_fn(x[None], target_elems=_target_elems)[0]


# --------------------------------------------------------------------------
# Pure-JAX references + self-test
# --------------------------------------------------------------------------
def _ref_rows(x2d, eps=_EPS):
    m = jnp.mean(x2d, axis=-1, keepdims=True)
    v = jnp.mean((x2d - m) ** 2, axis=-1, keepdims=True)
    return (x2d - m) / jnp.sqrt(v + eps)


def _ref_instance(x):
    N, C, D, H, W = x.shape
    return _ref_rows(x.reshape(N * C, -1)).reshape(x.shape)


def _ref_batch(x):
    N, C, D, H, W = x.shape
    xt = jnp.transpose(x, (1, 0, 2, 3, 4)).reshape(C, -1)
    return jnp.transpose(_ref_rows(xt).reshape(C, N, D, H, W), (1, 0, 2, 3, 4))


if __name__ == "__main__":
    key = jax.random.PRNGKey(0)
    k1, k2, k3 = jax.random.split(key, 3)

    N, C, D, H, W = 2, 4, 4, 8, 8  # small NCDHW input

    x_real = jax.random.normal(k1, (N, C, D, H, W), dtype=jnp.float32)
    x_cplx = jax.lax.complex(
        jax.random.normal(k2, (N, C, D, H, W), dtype=jnp.float32),
        jax.random.normal(k3, (N, C, D, H, W), dtype=jnp.float32),
    )

    # Fused single-pass path (default VMEM budget)
    y_inst = jax.block_until_ready(normalization(x_real, norm_type="instance"))
    y_batch = jax.block_until_ready(normalization(x_real, norm_type="batch"))
    y_cinst = jax.block_until_ready(normalization(x_cplx, norm_type="instance"))
    y_cbatch = jax.block_until_ready(normalization(x_cplx, norm_type="batch"))

    # Force the column-tiled two-pass path with a tiny block budget
    y_inst_t = jax.block_until_ready(
        normalization(x_real, norm_type="instance", _target_elems=8 * 128))
    y_batch_t = jax.block_until_ready(
        normalization(x_real, norm_type="batch", _target_elems=8 * 128))

    ref_i = _ref_instance(x_real)
    ref_b = _ref_batch(x_real)
    ref_ci = jax.lax.complex(_ref_instance(jnp.real(x_cplx)),
                             _ref_instance(jnp.imag(x_cplx)))
    ref_cb = jax.lax.complex(_ref_batch(jnp.real(x_cplx)),
                             _ref_batch(jnp.imag(x_cplx)))

    assert jnp.allclose(y_inst, ref_i, atol=1e-4, rtol=1e-4)
    assert jnp.allclose(y_batch, ref_b, atol=1e-4, rtol=1e-4)
    assert jnp.allclose(y_cinst, ref_ci, atol=1e-4, rtol=1e-4)
    assert jnp.allclose(y_cbatch, ref_cb, atol=1e-4, rtol=1e-4)
    assert jnp.allclose(y_inst_t, ref_i, atol=1e-4, rtol=1e-4)
    assert jnp.allclose(y_batch_t, ref_b, atol=1e-4, rtol=1e-4)

    # 'none' passthrough
    assert jnp.array_equal(normalization(x_real, norm_type="none"), x_real)

    print("KERNEL_OK")
</pallas_src>

<mosaic_0001>
module attributes {stable_mosaic.version = 11 : i64} {
  func.func @_fused_kernel(%arg0: i32, %arg1: i32, %arg2: memref<1x1x8x256xf32, #tpu.memory_space<vmem>>, %arg3: memref<1x1x8x256xf32, #tpu.memory_space<vmem>>) attributes {dimension_semantics = [#tpu.dimension_semantics<parallel>, #tpu.dimension_semantics<parallel>], iteration_bounds = array<i64: 1, 1>, scalar_prefetch = 0 : i64, scratch_operands = 0 : i64, tpu.core_type = #tpu.core_type<tc>, window_params = [{transform_indices = @transform_0, window_bounds = array<i64: 1, 1, 8, 256>}, {transform_indices = @transform_1, window_bounds = array<i64: 1, 1, 8, 256>}]} {
    %c0 = arith.constant 0 : index
    %c0_0 = arith.constant 0 : index
    %c0_1 = arith.constant 0 : index
    %c0_2 = arith.constant 0 : index
    %0 = vector.load %arg2[%c0, %c0_0, %c0_1, %c0_2] : memref<1x1x8x256xf32, #tpu.memory_space<vmem>>, vector<1x1x8x256xf32>
    %1 = vector.shape_cast %0 : vector<1x1x8x256xf32> to vector<1x8x256xf32>
    %cst = arith.constant dense<0.000000e+00> : vector<8xf32>
    %2 = vector.multi_reduction <add>, %1, %cst [0, 2] : vector<1x8x256xf32> to vector<8xf32>
    %3 = vector.shape_cast %2 : vector<8xf32> to vector<1x8x1xf32>
    %cst_3 = arith.constant 2.560000e+02 : f32
    %4 = vector.broadcast %cst_3 : f32 to vector<1x8x1xf32>
    %5 = arith.divf %3, %4 : vector<1x8x1xf32>
    %6 = vector.broadcast %5 : vector<1x8x1xf32> to vector<1x8x256xf32>
    %7 = arith.subf %1, %6 : vector<1x8x256xf32>
    %8 = arith.mulf %7, %7 : vector<1x8x256xf32>
    %cst_4 = arith.constant dense<0.000000e+00> : vector<8xf32>
    %9 = vector.multi_reduction <add>, %8, %cst_4 [0, 2] : vector<1x8x256xf32> to vector<8xf32>
    %10 = vector.shape_cast %9 : vector<8xf32> to vector<1x8x1xf32>
    %cst_5 = arith.constant 2.560000e+02 : f32
    %11 = vector.broadcast %cst_5 : f32 to vector<1x8x1xf32>
    %12 = arith.divf %10, %11 : vector<1x8x1xf32>
    %cst_6 = arith.constant 9.99999974E-6 : f32
    %13 = vector.broadcast %cst_6 : f32 to vector<1x8x1xf32>
    %14 = arith.addf %12, %13 : vector<1x8x1xf32>
    %15 = math.rsqrt %14 : vector<1x8x1xf32>
    %16 = vector.broadcast %15 : vector<1x8x1xf32> to vector<1x8x256xf32>
    %17 = arith.mulf %7, %16 : vector<1x8x256xf32>
    %c0_7 = arith.constant 0 : index
    %c0_8 = arith.constant 0 : index
    %c0_9 = arith.constant 0 : index
    %c0_10 = arith.constant 0 : index
    %18 = vector.load %arg3[%c0_7, %c0_8, %c0_9, %c0_10] : memref<1x1x8x256xf32, #tpu.memory_space<vmem>>, vector<1x1x8x256xf32>
    %19 = vector.shape_cast %18 : vector<1x1x8x256xf32> to vector<1x8x256xf32>
    %20 = vector.shape_cast %17 : vector<1x8x256xf32> to vector<1x1x8x256xf32>
    tpu.vector_store %arg3[%c0_7, %c0_8, %c0_9, %c0_10], %20 {strides = array<i32>} : memref<1x1x8x256xf32, #tpu.memory_space<vmem>>, vector<1x1x8x256xf32>,
    return
  }
  func.func @transform_0(%arg0: i32, %arg1: i32) -> (i32, i32, i32, i32) {
    %c0_i32 = arith.constant 0 : i32
    %c0_i32_0 = arith.constant 0 : i32
    %c0_i32_1 = arith.constant 0 : i32
    return %arg0, %c0_i32, %arg1, %c0_i32_0 : i32, i32, i32, i32
  }
  func.func @transform_1(%arg0: i32, %arg1: i32) -> (i32, i32, i32, i32) {
    %c0_i32 = arith.constant 0 : i32
    %c0_i32_0 = arith.constant 0 : i32
    %c0_i32_1 = arith.constant 0 : i32
    return %arg0, %c0_i32, %arg1, %c0_i32_0 : i32, i32, i32, i32
  }
}

</mosaic_0001>

<llo_original>
// kernel: normalization.1
$region0: #{normalization.1}
  #allocation0 [shape = 'u32[]', space=smem, size = 0x4, offset = 0x4, fixed_abs, tag = 'smem constant byte address 0x4 - core index']
  #allocation1 [shape = 'u32[144,128]{1,0:T(1,128)}', space=vmem, size = 0x12000, scoped, tag = 'internal scratch']
  %s0 = inlined_call_operand.vmem [shape: f32[1,1,8,256], index: 0, kind: input, shape index: {}]
  %s1 = inlined_call_operand.vmem [shape: f32[1,1,8,256], index: 1, kind: output, shape index: {}]
  %s2 = sld [smem:[#allocation0]]
  $region14: #{normalization.1} parent=0
    _
  %s4 = ssub.s32 1, %s2
  %s5 = scalar_select 0, %s4, %s2
  // Predicated region
  $region2: #{normalization.1} parent=0 // pred_check
    _
  $region3: #{normalization.1} parent=0 // pred_check_branch
    %7 = sbr.rel (0) target = $region5
  $region4: #{normalization.1} parent=0 // pred_region
    _
  $region5: #{normalization.1} parent=0 // pred_fallthru
    _
  %v8 = vld [vmem:[%s0] sm:$0xff]
  %v9 = vld [vmem:[%s0 + $0x8] sm:$0xff]
  %v10 = vadd.f32 %v8, %v9
  %11 = vadd.xlane.f32.xlu0 %v10
  %v12 = vpop.xlane.xlu0 %11
  %v13 = vrcp.pop 256.0
  %v14 = vmul.f32 %v12, %v13
  %v15 = vsub.f32 %v8, %v14
  %v16 = vsub.f32 %v9, %v14
  %v17 = vmul.f32 %v15, %v15
  %v18 = vmul.f32 %v16, %v16
  %v19 = vadd.f32 %v17, %v18
  %20 = vadd.xlane.f32.xlu0 %v19
  %v21 = vpop.xlane.xlu0 %20
  %v22 = vmul.f32 %v21, %v13
  %v23 = vadd.f32 %v22, 1e-05
  %v24 = vrsqrt.pop %v23
  %v25 = vmul.f32 %v15, %v24
  %v26 = vmul.f32 %v16, %v24
  %27 = vst [vmem:[%s1] sm:$0xff] %v25
  %28 = vst [vmem:[%s1 + $0x8] sm:$0xff] %v26
  // Predicated region
  $region6: #{normalization.1} parent=0 // pred_check
    _
  $region7: #{normalization.1} parent=0 // pred_check_branch
    %30 = sbr.rel (0) target = $region9
  $region8: #{normalization.1} parent=0 // pred_region
    _
  $region9: #{normalization.1} parent=0 // pred_fallthru
    _
  // Predicated region
  $region10: #{normalization.1} parent=0 // pred_check
    _
  $region11: #{normalization.1} parent=0 // pred_check_branch
    %32 = sbr.rel (0) target = $region13
  $region12: #{normalization.1} parent=0 // pred_region
    _
  $region13: #{normalization.1} parent=0 // pred_fallthru
    _

</llo_original>
